<compile_context>
chip_gen: v7x
topology: tpu7x:2x2x1
jax: 0.10.0
libtpu: 0.0.40
codegen_flags: <defaults>
</compile_context>

<pallas_src>
from functools import partial

import jax
import jax.numpy as jnp
from jax.experimental import pallas as pl
from jax.experimental.pallas import tpu as pltpu


_LANE_CANDIDATES = (512, 256, 128)        # lane-dense last dim (multiple of 128)
_TARGET_BLOCK_BYTES = 2 * 1024 * 1024     # ~2 MiB/block -> ~8 MiB double-buffered
_SUBLANE = {4: 8, 2: 16, 1: 32}           # itemsize -> sublane multiple (dtype-aware)


def _relu_dfqf_kernel(alpha_ref, x_ref, o_ref, *, num_bits: int):
    """ReLU -> unsigned fake-quant (quantize(..., signed=False)) on one tile."""
    qmax = float(2 ** num_bits - 1)           # unsigned: qmin == 0

    alpha = alpha_ref[0]                      # learnable clip value (SMEM scalar)
    delta = jnp.maximum(alpha / qmax, 1e-8)   # delta = max(alpha/qmax, 1e-8)

    x = x_ref[...].astype(jnp.float32)        # promote (bf16 inputs) for exact round
    # ReLU folded into the lower clamp: delta > 0, so clip(x/delta, 0, qmax)
    # == clip(relu(x)/delta, 0, qmax).  Exact divide for parity with torch.
    t_q = jnp.clip(x / delta, 0.0, qmax)
    t_q = jnp.round(t_q)                      # RoundSTE forward == torch.round
    # TODO(synk): torch asserts alpha > 0 and unique(t_q) <= 2**num_bits; no
    # in-kernel runtime assert equivalent, omitted.
    o_ref[...] = (t_q * delta).astype(o_ref.dtype)


def relu_dfqf(x: jax.Array, clip_a: jax.Array, num_bits: int = 8,
              donate_input: bool = False) -> jax.Array:
    """x: any-shape float activation (e.g. NCHW), clip_a: (1,) learnable clip."""
    orig_shape = x.shape
    total = x.size
    itemsize = jnp.dtype(x.dtype).itemsize
    sub = _SUBLANE.get(itemsize, 8)

    flat = x.reshape(-1)                      # contiguous reshape: free

    lane = next((l for l in _LANE_CANDIDATES if total % l == 0), None)
    padded = False
    if lane is None:
        # Rare odd-size fallback: pad the tail up to one lane (copies the
        # activation once).  All common conv/MLP activation sizes avoid this.
        # TODO(synk): could be replaced with a fused jnp tail expression.
        lane = 128
        flat = jnp.pad(flat, (0, (-total) % lane))
        padded = True
    m_rows = flat.size // lane

    if m_rows <= sub:
        tm = m_rows                            # block == full array (layout exemption)
    else:
        # ~2 MiB blocks, but capped so the grid has >= 2 steps (v7x megacore).
        tm_bytes = max(sub, (_TARGET_BLOCK_BYTES // (lane * itemsize)) // sub * sub)
        tm_half = max(sub, (m_rows // 2) // sub * sub)
        tm = min(tm_bytes, tm_half)

    x2 = flat.reshape(m_rows, lane)
    grid = (pl.cdiv(m_rows, tm),)             # partial last block masked by Pallas

    out2 = pl.pallas_call(
        partial(_relu_dfqf_kernel, num_bits=num_bits),
        out_shape=jax.ShapeDtypeStruct((m_rows, lane), x.dtype),
        grid=grid,
        in_specs=[
            pl.BlockSpec(memory_space=pltpu.SMEM),          # alpha scalar in SMEM
            pl.BlockSpec((tm, lane), lambda i: (i, 0)),     # lane-dense input tile
        ],
        out_specs=pl.BlockSpec((tm, lane), lambda i: (i, 0)),
        compiler_params=pltpu.CompilerParams(
            dimension_semantics=("parallel",)),             # megacore sharding (v7x)
        cost_estimate=pl.CostEstimate(
            flops=5 * m_rows * lane,
            transcendentals=0,
            bytes_accessed=2 * m_rows * lane * itemsize + 4),
        input_output_aliases=({1: 0} if donate_input else {}),
    )(clip_a, x2)

    out_flat = out2.reshape(-1)
    if padded:
        out_flat = out_flat[:total]
    return out_flat.reshape(orig_shape)


def _reference(x, clip_a, num_bits):
    """Pure-JAX reference of the PyTorch forward."""
    qmax = float(2 ** num_bits - 1)
    delta = jnp.maximum(clip_a[0].astype(jnp.float32) / qmax, 1e-8)
    xr = jnp.maximum(x.astype(jnp.float32), 0.0)
    t_q = jnp.round(jnp.clip(xr / delta, 0.0, qmax))
    return (t_q * delta).astype(x.dtype)


if __name__ == "__main__":
    key = jax.random.PRNGKey(0)
    k1, k2, k3 = jax.random.split(key, 3)

    num_bits = 8
    clip_a = jnp.array([6.0], dtype=jnp.float32)   # init_act_clip_val = 6.0

    # Primary shape from the module spec (NCHW conv activation): single block,
    # block == full array.
    x1 = jax.random.normal(k1, (2, 4, 16, 16), dtype=jnp.float32)
    o1 = jax.block_until_ready(relu_dfqf(x1, clip_a, num_bits=num_bits))
    assert o1.shape == x1.shape and o1.dtype == x1.dtype
    assert jnp.allclose(o1, _reference(x1, clip_a, num_bits), atol=1e-6, rtol=1e-6)

    # Row count (18) not a multiple of the tile (8): exercises the masked
    # partial last block path (no jnp.pad / slice round-trip).
    x2 = 3.0 * jax.random.normal(k2, (2, 4, 24, 48), dtype=jnp.float32)
    o2 = jax.block_until_ready(relu_dfqf(x2, clip_a, num_bits=num_bits))
    assert jnp.allclose(o2, _reference(x2, clip_a, num_bits), atol=1e-6, rtol=1e-6)

    # bf16 activations (halves HBM bytes for this memory-bound op); dtype-aware
    # sublane tiling (16) and a 2-step parallel grid.
    x3 = jax.random.normal(k3, (4, 8, 32, 32), dtype=jnp.bfloat16)
    o3 = jax.block_until_ready(relu_dfqf(x3, clip_a, num_bits=num_bits))
    assert o3.shape == x3.shape and o3.dtype == jnp.bfloat16
    assert jnp.allclose(o3.astype(jnp.float32),
                        _reference(x3, clip_a, num_bits).astype(jnp.float32),
                        atol=1e-6, rtol=1e-6)

    print("KERNEL_OK")
</pallas_src>

<mosaic_0001>
module attributes {stable_mosaic.version = 11 : i64} {
  func.func @_relu_dfqf_kernel(%arg0: i32, %arg1: memref<1xf32, #tpu.memory_space<smem>>, %arg2: memref<4x512xf32, #tpu.memory_space<vmem>>, %arg3: memref<4x512xf32, #tpu.memory_space<vmem>>) attributes {dimension_semantics = [#tpu.dimension_semantics<parallel>], iteration_bounds = array<i64: 1>, scalar_prefetch = 0 : i64, scratch_operands = 0 : i64, tpu.core_type = #tpu.core_type<tc>, window_params = [{transform_indices = @transform_0, window_bounds = array<i64: 1>}, {transform_indices = @transform_1, window_bounds = array<i64: 4, 512>}, {transform_indices = @transform_2, window_bounds = array<i64: 4, 512>}]} {
    %c0 = arith.constant 0 : index
    %0 = memref.load %arg1[%c0] : memref<1xf32, #tpu.memory_space<smem>>
    %cst = arith.constant 2.550000e+02 : f32
    %1 = arith.divf %0, %cst : f32
    %cst_0 = arith.constant 9.99999993E-9 : f32
    %2 = arith.maximumf %1, %cst_0 : f32
    %c0_1 = arith.constant 0 : index
    %c0_2 = arith.constant 0 : index
    %3 = vector.load %arg2[%c0_1, %c0_2] : memref<4x512xf32, #tpu.memory_space<vmem>>, vector<4x512xf32>
    %4 = vector.broadcast %2 : f32 to vector<4x512xf32>
    %5 = arith.divf %3, %4 : vector<4x512xf32>
    %cst_3 = arith.constant 0.000000e+00 : f32
    %cst_4 = arith.constant 2.550000e+02 : f32
    %6 = vector.broadcast %cst_3 : f32 to vector<4x512xf32>
    %7 = arith.maximumf %6, %5 : vector<4x512xf32>
    %8 = vector.broadcast %cst_4 : f32 to vector<4x512xf32>
    %9 = arith.minimumf %8, %7 : vector<4x512xf32>
    %10 = math.roundeven %9 : vector<4x512xf32>
    %11 = vector.broadcast %2 : f32 to vector<4x512xf32>
    %12 = arith.mulf %10, %11 : vector<4x512xf32>
    %c0_5 = arith.constant 0 : index
    %c0_6 = arith.constant 0 : index
    %13 = vector.load %arg3[%c0_5, %c0_6] : memref<4x512xf32, #tpu.memory_space<vmem>>, vector<4x512xf32>
    tpu.vector_store %arg3[%c0_5, %c0_6], %12 {strides = array<i32>} : memref<4x512xf32, #tpu.memory_space<vmem>>, vector<4x512xf32>,
    return
  }
  func.func @transform_0(%arg0: i32) -> i32 {
    %c0_i32 = arith.constant 0 : i32
    %c0_i32_0 = arith.constant 0 : i32
    return %c0_i32 : i32
  }
  func.func @transform_1(%arg0: i32) -> (i32, i32) {
    %c0_i32 = arith.constant 0 : i32
    %c0_i32_0 = arith.constant 0 : i32
    return %arg0, %c0_i32 : i32, i32
  }
  func.func @transform_2(%arg0: i32) -> (i32, i32) {
    %c0_i32 = arith.constant 0 : i32
    %c0_i32_0 = arith.constant 0 : i32
    return %arg0, %c0_i32 : i32, i32
  }
}

</mosaic_0001>

<llo_original>
// kernel: tpu_custom_call.1
$region0: #{tpu_custom_call.1}
  #allocation0 [shape = 'u32[]', space=smem, size = 0x4, offset = 0x4, fixed_abs, tag = 'smem constant byte address 0x4 - core index']
  #allocation1 [shape = 'u32[144,128]{1,0:T(1,128)}', space=vmem, size = 0x12000, scoped, tag = 'internal scratch']
  #allocation2 [shape = 'f32[1]{0:T(128)S(6)}', space=smem, size = 0x200, scoped, tag = 'scoped memory for tpu_custom_call.1']
  %s0 = inlined_call_operand.<no memory space> [shape: f32[1], index: 0, kind: input, shape index: {}]
  %s1 = inlined_call_operand.hbm [shape: f32[4,512], index: 1, kind: input, shape index: {}]
  %s2 = inlined_call_operand.hbm [shape: f32[4,512], index: 2, kind: output, shape index: {}]
  %s3 = sld [smem:[#allocation0]]
  $region22: #{tpu_custom_call.1} parent=0
    _
  %s5 = ssub.s32 1, %s3
  %s6 = scalar_select 0, %s5, %s3
  %7 = sst [smem:[#allocation2]] %s0
  $region1: #{tpu_custom_call.1} parent=0
    #allocation3 [shape = 'u8[8192]{0}', space=vmem, size = 0x2000, scoped, tag = 'input window, operand 1, single buffered']
    #allocation4 [shape = 's32[1]{0}', space=sflag, size = 0x4, scoped, tag = 'scoped memory for tpu_custom_call.1']
    #allocation5 [shape = 's32[1]{0}', space=sflag, size = 0x4, scoped, tag = 'scoped memory for tpu_custom_call.1']
    #allocation6 [shape = 'u8[8192]{0}', space=vmem, size = 0x2000, scoped, tag = 'output window, operand 0, single buffered']
    %8 = vsyncpa [#allocation4], 0
    %9 = vsyncpa [#allocation5], 0
    // Predicated region
    $region2: #{tpu_custom_call.1} parent=1 // pred_check
      _
    $region3: #{tpu_custom_call.1} parent=1 // pred_check_branch
      %11 = sbr.rel (0) target = $region5
    $region4: #{tpu_custom_call.1} parent=1 // pred_region
      _
    $region5: #{tpu_custom_call.1} parent=1 // pred_fallthru
      _
    // Predicated region
    $region6: #{tpu_custom_call.1} parent=1 // pred_check
      _
    $region7: #{tpu_custom_call.1} parent=1 // pred_check_branch
      %13 = sbr.rel (0) target = $region9
    $region8: #{tpu_custom_call.1} parent=1 // pred_region
      %s15 = ssub.s32 256, 256
      %16 = vsyncadd [#allocation4], %s15
      %s18 = sshll.u32 [#allocation3], 4
      %s19 = int_to_ptr.vmem [resolvable:$true] %s18
      %21 = dma.hbm_to_vmem [thread:$0]  %s1, 256, %s19, [#allocation4]
    $region9: #{tpu_custom_call.1} parent=1 // pred_fallthru
      _
    // Predicated region
    $region10: #{tpu_custom_call.1} parent=1 // pred_check
      _
    $region11: #{tpu_custom_call.1} parent=1 // pred_check_branch
      %23 = sbr.rel (0) target = $region13
    $region12: #{tpu_custom_call.1} parent=1 // pred_region
      %24 = dma.done [#allocation4], 256
    $region13: #{tpu_custom_call.1} parent=1 // pred_fallthru
      _
    %s25 = sld [smem:[#allocation2]]
    %v26 = vrcp.pop 255.0
    %s27 = vtos %v26
    %s28 = smul.f32 %s25, %s27
    %s29 = smax.f32 %s28, 1e-08
    %v30 = vld [vmem:[#allocation3] sm:$0xff]
    %v31 = vld [vmem:[#allocation3 + $0x8] sm:$0xff]
    %v32 = vstv %s29
    %v33 = vrcp.pop %v32
    %v34 = vmul.f32 %v30, %v33
    %v35 = vmul.f32 %v31, %v33
    %v36 = vmax.f32 %v34, 0.0
    %v37 = vmax.f32 %v35, 0.0
    %v38 = vmin.f32 %v36, 255.0
    %v39 = vmin.f32 %v37, 255.0
    %v40 = vround.ne.pseudo %v38
    %v41 = vround.ne.pseudo %v39
    %v42 = vmul.f32 %v40, %v32
    %v43 = vmul.f32 %v41, %v32
    %44 = vst [vmem:[#allocation6] sm:$0xff] %v42
    %45 = vst [vmem:[#allocation6 + $0x8] sm:$0xff] %v43
    // Predicated region
    $region14: #{tpu_custom_call.1} parent=1 // pred_check
      _
    $region15: #{tpu_custom_call.1} parent=1 // pred_check_branch
      %47 = sbr.rel (0) target = $region17
    $region16: #{tpu_custom_call.1} parent=1 // pred_region
      %s49 = ssub.s32 256, 256
      %50 = vsyncadd [#allocation5], %s49
      %s52 = sshll.u32 [#allocation6], 4
      %s53 = int_to_ptr.vmem [resolvable:$true] %s52
      %55 = dma.vmem_to_hbm [thread:$0]  %s53, 256, %s2, [#allocation5]
    $region17: #{tpu_custom_call.1} parent=1 // pred_fallthru
      _
    // Predicated region
    $region18: #{tpu_custom_call.1} parent=1 // pred_check
      _
    $region19: #{tpu_custom_call.1} parent=1 // pred_check_branch
      %57 = sbr.rel (0) target = $region21
    $region20: #{tpu_custom_call.1} parent=1 // pred_region
      %58 = dma.done [#allocation5], 256
    $region21: #{tpu_custom_call.1} parent=1 // pred_fallthru
      _
    %59 = vsyncpa [#allocation4], 1
    %60 = vsyncpa [#allocation5], 1

</llo_original>
